<compile_context>
chip_gen: v7x
topology: tpu7x:2x2x1
jax: 0.10.0
libtpu: 0.0.40
codegen_flags: <defaults>
</compile_context>

<pallas_src>
import functools

import jax
import jax.numpy as jnp
from jax.experimental import pallas as pl
from jax.experimental.pallas import tpu as pltpu


def _round_up(x, m):
    return ((x + m - 1) // m) * m


def _vmem_plan():
    """Return (tile-sizing budget, scoped vmem_limit_bytes) for this chip."""
    cap = 128 * 1024 * 1024                        # v5e / v6e default
    try:
        info = pltpu.get_tpu_info()
        cap = int(getattr(info, "vmem_capacity_bytes", cap) or cap)
    except Exception:                              # interpret mode / non-TPU
        pass
    budget = int(cap * 0.35)                       # what the tile heuristic may plan for
    vmem_limit = min(int(cap * 0.75), 128 * 1024 * 1024)
    return budget, vmem_limit


def _class_sum_f32(x):
    """Row-wise sum over the class (lane) axis, accumulated in f32.

    Sub-32-bit inputs go through the otherwise-idle MXU as a ones-matvec
    (exact: narrow values accumulated in f32); f32 inputs keep the XLU
    lane-reduce to avoid rounding through bf16 in a DEFAULT-precision matmul.
    """
    if x.dtype == jnp.float32:
        return jnp.sum(x, axis=-1, keepdims=True)
    ones = jnp.ones((x.shape[-1], 128), dtype=x.dtype)
    return jnp.dot(x, ones, preferred_element_type=jnp.float32)[:, :1]


def _row_loss(eps, c_total, lse, sum_x, tgt_x):
    # eps/C * (-sum_j log_softmax_j) + (1-eps) * (-log_softmax_target)
    eps_f = jnp.float32(eps)
    c_f = jnp.float32(c_total)
    return (eps_f / c_f) * (c_f * lse - sum_x) \
        + (jnp.float32(1.0) - eps_f) * (lse - tgt_x)


def _emit_block_partial(n_total, contrib, out_ref):
    tile_n = contrib.shape[0]
    row0 = pl.program_id(0) * tile_n
    row_ids = row0 + jax.lax.broadcasted_iota(jnp.int32, (tile_n, 1), 0)
    contrib = jnp.where(row_ids < n_total, contrib, 0.0)   # mask padded rows
    partial = jnp.sum(contrib)
    lane = jax.lax.broadcasted_iota(jnp.int32, (1, 1, 128), 2)
    out_ref[...] = jnp.where(lane == 0, partial, 0.0)      # lane-dense block output


def _lsce_kernel_single(eps, n_total, logits_ref, target_ref, out_ref):
    """Whole class axis in one block; 1-D grid over row tiles."""
    x = logits_ref[...]                            # (tile_n, C), input dtype (no f32 copy)
    t = target_ref[...]                            # (tile_n, 1) int32
    tile_n, c = x.shape

    # Row max in the input dtype; only the per-row scalar is widened.
    row_max = jnp.max(x, axis=-1, keepdims=True).astype(jnp.float32)

    # exp-sum sweep (convert + sub + exp + reduce, accumulated in f32).
    sum_exp = jnp.sum(jnp.exp(x.astype(jnp.float32) - row_max),
                      axis=-1, keepdims=True)
    lse = row_max + jnp.log(sum_exp)

    # sum_j x_ij (idle MXU for bf16, XLU reduce for f32).
    sum_x = _class_sum_f32(x)

    # Target logit via compare + select + lane reduce (no one-hot multiply).
    col = jax.lax.broadcasted_iota(jnp.int32, (tile_n, c), 1)
    tgt_x = jnp.sum(jnp.where(col == t, x.astype(jnp.float32), 0.0),
                    axis=-1, keepdims=True)

    contrib = _row_loss(eps, c, lse, sum_x, tgt_x)
    _emit_block_partial(n_total, contrib, out_ref)


def _lsce_kernel_chunked(eps, n_total, c_total,
                         logits_ref, target_ref, out_ref,
                         m_sc, l_sc, sumx_sc, tgt_sc):
    """Class axis chunked: online logsumexp + running sum_x / tgt_x in scratch."""
    ci = pl.program_id(1)
    nc = pl.num_programs(1)

    @pl.when(ci == 0)
    def _():
        m_sc[...] = jnp.full_like(m_sc, -jnp.inf)
        l_sc[...] = jnp.zeros_like(l_sc)
        sumx_sc[...] = jnp.zeros_like(sumx_sc)
        tgt_sc[...] = jnp.zeros_like(tgt_sc)

    x = logits_ref[...]                            # (tile_n, tile_c), input dtype
    t = target_ref[...]                            # (tile_n, 1) int32
    tile_n, tile_c = x.shape

    col = ci * tile_c + jax.lax.broadcasted_iota(jnp.int32, (tile_n, tile_c), 1)
    has_col_pad = (c_total % tile_c) != 0          # static Python condition
    valid = (col < c_total) if has_col_pad else None

    # Online row max.
    x_for_max = jnp.where(valid, x, jnp.array(-jnp.inf, dtype=x.dtype)) \
        if has_col_pad else x
    chunk_max = jnp.max(x_for_max, axis=-1, keepdims=True).astype(jnp.float32)
    m_old = m_sc[...]
    m_new = jnp.maximum(m_old, chunk_max)

    # Online exp-sum (rescale the running sum by exp(m_old - m_new)).
    e = jnp.exp(x.astype(jnp.float32) - m_new)
    if has_col_pad:
        e = jnp.where(valid, e, 0.0)
    l_sc[...] = l_sc[...] * jnp.exp(m_old - m_new) + jnp.sum(e, axis=-1, keepdims=True)
    m_sc[...] = m_new

    # Running sum over classes (idle MXU for bf16).
    x_for_sum = jnp.where(valid, x, jnp.zeros((), dtype=x.dtype)) \
        if has_col_pad else x
    sumx_sc[...] += _class_sum_f32(x_for_sum)

    # Running target logit (padded column ids are >= C so they never match t).
    tgt_sc[...] += jnp.sum(jnp.where(col == t, x.astype(jnp.float32), 0.0),
                           axis=-1, keepdims=True)

    @pl.when(ci == nc - 1)
    def _():
        lse = m_sc[...] + jnp.log(l_sc[...])
        contrib = _row_loss(eps, c_total, lse, sumx_sc[...], tgt_sc[...])
        _emit_block_partial(n_total, contrib, out_ref)


def label_smoothing_cross_entropy(logits, target, eps=0.3, reduction="mean"):
    """logits: (N, C) float (f32 or bf16); target: (N,) int.  Returns scalar f32."""
    if reduction not in ("mean", "sum"):
        # TODO(synk): reduction='none' (per-row loss) not supported by this kernel.
        raise NotImplementedError("reduction='none' not supported by this kernel")

    n, c = logits.shape
    target2d = target.astype(jnp.int32).reshape(n, 1)
    itemsize = jnp.dtype(logits.dtype).itemsize

    budget, vmem_limit = _vmem_plan()

    def bytes_per_row(tile_c, n_buf, with_scratch):
        b = tile_c * itemsize * n_buf              # multi-buffered logits blocks
        b += 2 * 128 * 4                           # (tile_n,1) i32 target pads to 128 lanes, x2 buffers
        b += 3 * tile_c * 4                        # live f32/i32 temporaries in the sweeps
        b += 128 * 4                               # MXU ones-matvec result column
        if with_scratch:
            b += 4 * 128 * 4                       # four (tile_n,1) f32 online accumulators (lane padded)
        return b

    # Class chunking is required when even a minimal 8-row full-C block does
    # not fit the budget (vocab-scale C, especially on v7x's 64 MiB VMEM).
    single_pass = 8 * bytes_per_row(c, 2, False) <= budget

    def cap_rows_for_megacore(tile_n):
        # Keep >= 2 (>= 4 for larger batches) row blocks so the 'parallel' row
        # axis load-balances across v7x's two TensorCores.
        if n <= 8:
            return tile_n
        target_blocks = 4 if n >= 32 else 2
        return min(tile_n, max(8, _round_up(pl.cdiv(n, target_blocks), 8)))

    if single_pass:
        tile_c = c
        max_rows = budget // bytes_per_row(tile_c, 2, False)
        tile_n = min(_round_up(n, 8), 8192, (max_rows // 8) * 8)
        tile_n = max(8, cap_rows_for_megacore(tile_n))
        num_c_blocks = 1
    else:
        tile_c = min(_round_up(c, 128), 4096)      # ~multi-MiB class chunks
        max_rows = budget // bytes_per_row(tile_c, 3, True)
        tile_n = min(_round_up(n, 8), 1024, max(8, (max_rows // 8) * 8))
        tile_n = max(8, cap_rows_for_megacore(tile_n))
        num_c_blocks = pl.cdiv(c, tile_c)

    num_row_blocks = pl.cdiv(n, tile_n)

    cost = pl.CostEstimate(
        flops=7 * n * c,
        transcendentals=n * c,
        bytes_accessed=n * c * itemsize + n * 4 + num_row_blocks * 128 * 4,
    )

    if single_pass:
        kernel = functools.partial(_lsce_kernel_single, float(eps), int(n))
        grid = (num_row_blocks,)
        in_specs = [
            pl.BlockSpec((tile_n, tile_c), lambda i: (i, 0)),   # logits tile
            pl.BlockSpec((tile_n, 1), lambda i: (i, 0)),        # target tile
        ]
        out_specs = pl.BlockSpec((1, 1, 128), lambda i: (i, 0, 0))
        scratch_shapes = []
        dim_sems = ("parallel",)
    else:
        kernel = functools.partial(_lsce_kernel_chunked, float(eps), int(n), int(c))
        grid = (num_row_blocks, num_c_blocks)      # class chunks last ('arbitrary')
        in_specs = [
            pl.BlockSpec((tile_n, tile_c), lambda i, j: (i, j),
                         pipeline_mode=pl.Buffered(3)),
            pl.BlockSpec((tile_n, 1), lambda i, j: (i, 0)),
        ]
        out_specs = pl.BlockSpec((1, 1, 128), lambda i, j: (i, 0, 0))
        scratch_shapes = [pltpu.VMEM((tile_n, 1), jnp.float32) for _ in range(4)]
        dim_sems = ("parallel", "arbitrary")

    partials = pl.pallas_call(
        kernel,
        out_shape=jax.ShapeDtypeStruct((num_row_blocks, 1, 128), jnp.float32),
        grid=grid,
        in_specs=in_specs,
        out_specs=out_specs,
        scratch_shapes=scratch_shapes,
        compiler_params=pltpu.CompilerParams(
            dimension_semantics=dim_sems,
            vmem_limit_bytes=int(vmem_limit),
        ),
        cost_estimate=cost,
    )(logits, target2d)

    total = jnp.sum(partials[:, 0, 0])
    if reduction == "mean":
        return total / jnp.float32(n)
    return total


def _reference(logits, target, eps=0.3):
    lp = jax.nn.log_softmax(logits.astype(jnp.float32), axis=-1)
    n, c = logits.shape
    return (-lp.sum(axis=-1)).mean() * eps / c \
        + (1.0 - eps) * (-lp[jnp.arange(n), target]).mean()


if __name__ == "__main__":
    key = jax.random.PRNGKey(0)
    k1, k2, k3, k4, k5, k6 = jax.random.split(key, 6)

    # Test 1: small aligned shape, f32.
    N, C = 8, 32
    logits = jax.random.normal(k1, (N, C), dtype=jnp.float32)
    target = jax.random.randint(k2, (N,), 0, C, dtype=jnp.int32)
    loss = jax.block_until_ready(label_smoothing_cross_entropy(logits, target, eps=0.3))
    ref = _reference(logits, target, eps=0.3)
    assert jnp.allclose(loss, ref, atol=1e-5, rtol=1e-5), (loss, ref)

    # Test 2: batch not a multiple of 8 (partial-block masking, >=2 row blocks).
    N2, C2 = 13, 40
    logits2 = jax.random.normal(k3, (N2, C2), dtype=jnp.float32)
    target2 = jax.random.randint(k4, (N2,), 0, C2, dtype=jnp.int32)
    loss2 = jax.block_until_ready(label_smoothing_cross_entropy(logits2, target2, eps=0.3))
    ref2 = _reference(logits2, target2, eps=0.3)
    assert jnp.allclose(loss2, ref2, atol=1e-5, rtol=1e-5), (loss2, ref2)

    # Test 3: bf16 logits (halved HBM traffic; exercises the MXU ones-matvec sum).
    N3, C3 = 24, 64
    logits3 = jax.random.normal(k5, (N3, C3), dtype=jnp.float32).astype(jnp.bfloat16)
    target3 = jax.random.randint(k6, (N3,), 0, C3, dtype=jnp.int32)
    loss3 = jax.block_until_ready(label_smoothing_cross_entropy(logits3, target3, eps=0.3))
    ref3 = _reference(logits3, target3, eps=0.3)
    assert jnp.allclose(loss3, ref3, atol=1e-4, rtol=1e-4), (loss3, ref3)

    print("KERNEL_OK")
</pallas_src>

<mosaic_0001>
module attributes {stable_mosaic.version = 11 : i64} {
  func.func @_lsce_kernel_single(%arg0: i32, %arg1: memref<8x32xf32, #tpu.memory_space<vmem>>, %arg2: memref<8x1xi32, #tpu.memory_space<vmem>>, %arg3: memref<1x1x128xf32, #tpu.memory_space<vmem>>) attributes {dimension_semantics = [#tpu.dimension_semantics<parallel>], iteration_bounds = array<i64: 1>, scalar_prefetch = 0 : i64, scratch_operands = 0 : i64, tpu.core_type = #tpu.core_type<tc>, window_params = [{transform_indices = @transform_0, window_bounds = array<i64: 8, 32>}, {transform_indices = @transform_1, window_bounds = array<i64: 8, 1>}, {transform_indices = @transform_2, window_bounds = array<i64: 1, 1, 128>}]} {
    %c0 = arith.constant 0 : index
    %c0_0 = arith.constant 0 : index
    %0 = vector.load %arg1[%c0, %c0_0] : memref<8x32xf32, #tpu.memory_space<vmem>>, vector<8x32xf32>
    %c0_1 = arith.constant 0 : index
    %c0_2 = arith.constant 0 : index
    %1 = vector.load %arg2[%c0_1, %c0_2] : memref<8x1xi32, #tpu.memory_space<vmem>>, vector<8x1xi32>
    %cst = arith.constant dense<0xFF800000> : vector<8xf32>
    %2 = vector.multi_reduction <maximumf>, %0, %cst [1] : vector<8x32xf32> to vector<8xf32>
    %3 = vector.shape_cast %2 : vector<8xf32> to vector<8x1xf32>
    %4 = vector.broadcast %3 : vector<8x1xf32> to vector<8x32xf32>
    %5 = arith.subf %0, %4 : vector<8x32xf32>
    %6 = math.exp %5 : vector<8x32xf32>
    %cst_3 = arith.constant dense<0.000000e+00> : vector<8xf32>
    %7 = vector.multi_reduction <add>, %6, %cst_3 [1] : vector<8x32xf32> to vector<8xf32>
    %8 = vector.shape_cast %7 : vector<8xf32> to vector<8x1xf32>
    %9 = math.log %8 : vector<8x1xf32>
    %10 = arith.addf %3, %9 : vector<8x1xf32>
    %cst_4 = arith.constant dense<0.000000e+00> : vector<8xf32>
    %11 = vector.multi_reduction <add>, %0, %cst_4 [1] : vector<8x32xf32> to vector<8xf32>
    %12 = vector.shape_cast %11 : vector<8xf32> to vector<8x1xf32>
    %13 = tpu.iota {dimensions = array<i32: 1>} : vector<8x32xi32>
    %14 = vector.broadcast %1 : vector<8x1xi32> to vector<8x32xi32>
    %15 = arith.cmpi eq, %13, %14 : vector<8x32xi32>
    %cst_5 = arith.constant 0.000000e+00 : f32
    %16 = vector.broadcast %cst_5 : f32 to vector<8x32xf32>
    %17 = arith.select %15, %0, %16 : vector<8x32xi1>, vector<8x32xf32>
    %cst_6 = arith.constant dense<0.000000e+00> : vector<8xf32>
    %18 = vector.multi_reduction <add>, %17, %cst_6 [1] : vector<8x32xf32> to vector<8xf32>
    %19 = vector.shape_cast %18 : vector<8xf32> to vector<8x1xf32>
    %cst_7 = arith.constant 3.000000e-01 : f32
    %cst_8 = arith.constant 3.200000e+01 : f32
    %20 = arith.divf %cst_7, %cst_8 : f32
    %cst_9 = arith.constant 3.200000e+01 : f32
    %21 = vector.broadcast %cst_9 : f32 to vector<8x1xf32>
    %22 = arith.mulf %21, %10 : vector<8x1xf32>
    %23 = arith.subf %22, %12 : vector<8x1xf32>
    %24 = vector.broadcast %20 : f32 to vector<8x1xf32>
    %25 = arith.mulf %24, %23 : vector<8x1xf32>
    %cst_10 = arith.constant 1.000000e+00 : f32
    %cst_11 = arith.constant 3.000000e-01 : f32
    %26 = arith.subf %cst_10, %cst_11 : f32
    %27 = arith.subf %10, %19 : vector<8x1xf32>
    %28 = vector.broadcast %26 : f32 to vector<8x1xf32>
    %29 = arith.mulf %28, %27 : vector<8x1xf32>
    %30 = arith.addf %25, %29 : vector<8x1xf32>
    %c8_i32 = arith.constant 8 : i32
    %31 = arith.muli %arg0, %c8_i32 : i32
    %32 = tpu.iota {dimensions = array<i32: 0>} : vector<8x1xi32>
    %33 = vector.broadcast %31 : i32 to vector<8x1xi32>
    %34 = arith.addi %33, %32 : vector<8x1xi32>
    %c8_i32_12 = arith.constant 8 : i32
    %35 = vector.broadcast %c8_i32_12 : i32 to vector<8x1xi32>
    %36 = arith.cmpi slt, %34, %35 : vector<8x1xi32>
    %cst_13 = arith.constant 0.000000e+00 : f32
    %37 = vector.broadcast %cst_13 : f32 to vector<8x1xf32>
    %38 = arith.select %36, %30, %37 : vector<8x1xi1>, vector<8x1xf32>
    %39 = vector.shape_cast %38 : vector<8x1xf32> to vector<1x8x1xf32>
    %cst_14 = arith.constant dense<0.000000e+00> : vector<1xf32>
    %40 = vector.multi_reduction <add>, %39, %cst_14 [1, 2] : vector<1x8x1xf32> to vector<1xf32>
    %41 = vector.shape_cast %40 : vector<1xf32> to vector<1x1x1xf32>
    %42 = vector.extract %41[0, 0, 0] : f32 from vector<1x1x1xf32>
    %43 = tpu.iota {dimensions = array<i32: 2>} : vector<1x1x128xi32>
    %c0_i32 = arith.constant 0 : i32
    %44 = vector.broadcast %c0_i32 : i32 to vector<1x1x128xi32>
    %45 = arith.cmpi eq, %43, %44 : vector<1x1x128xi32>
    %cst_15 = arith.constant 0.000000e+00 : f32
    %46 = vector.broadcast %42 : f32 to vector<1x1x128xf32>
    %47 = vector.broadcast %cst_15 : f32 to vector<1x1x128xf32>
    %48 = arith.select %45, %46, %47 : vector<1x1x128xi1>, vector<1x1x128xf32>
    %c0_16 = arith.constant 0 : index
    %c0_17 = arith.constant 0 : index
    %c0_18 = arith.constant 0 : index
    %49 = vector.load %arg3[%c0_16, %c0_17, %c0_18] : memref<1x1x128xf32, #tpu.memory_space<vmem>>, vector<1x1x128xf32>
    tpu.vector_store %arg3[%c0_16, %c0_17, %c0_18], %48 {strides = array<i32>} : memref<1x1x128xf32, #tpu.memory_space<vmem>>, vector<1x1x128xf32>,
    return
  }
  func.func @transform_0(%arg0: i32) -> (i32, i32) {
    %c0_i32 = arith.constant 0 : i32
    %c0_i32_0 = arith.constant 0 : i32
    return %arg0, %c0_i32 : i32, i32
  }
  func.func @transform_1(%arg0: i32) -> (i32, i32) {
    %c0_i32 = arith.constant 0 : i32
    %c0_i32_0 = arith.constant 0 : i32
    return %arg0, %c0_i32 : i32, i32
  }
  func.func @transform_2(%arg0: i32) -> (i32, i32, i32) {
    %c0_i32 = arith.constant 0 : i32
    %c0_i32_0 = arith.constant 0 : i32
    %c0_i32_1 = arith.constant 0 : i32
    return %arg0, %c0_i32, %c0_i32_0 : i32, i32, i32
  }
}

</mosaic_0001>

<llo_original>
// kernel: tpu_custom_call.1
$region0: #{tpu_custom_call.1}
  #allocation0 [shape = 'u32[]', space=smem, size = 0x4, offset = 0x4, fixed_abs, tag = 'smem constant byte address 0x4 - core index']
  #allocation1 [shape = 'u32[144,128]{1,0:T(1,128)}', space=vmem, size = 0x12000, scoped, tag = 'internal scratch']
  %s0 = inlined_call_operand.hbm [shape: f32[8,32], index: 0, kind: input, shape index: {}]
  %s1 = inlined_call_operand.hbm [shape: s32[8,1], index: 1, kind: input, shape index: {}]
  %s2 = inlined_call_operand.hbm [shape: f32[1,1,128], index: 2, kind: output, shape index: {}]
  %s3 = sld [smem:[#allocation0]]
  $region26: #{tpu_custom_call.1} parent=0
    _
  %s5 = ssub.s32 1, %s3
  %s6 = scalar_select 0, %s5, %s3
  $region1: #{tpu_custom_call.1} parent=0
    #allocation2 [shape = 'u8[4096]{0}', space=vmem, size = 0x1000, scoped, tag = 'input window, operand 0, single buffered']
    #allocation3 [shape = 's32[1]{0}', space=sflag, size = 0x4, scoped, tag = 'scoped memory for tpu_custom_call.1']
    #allocation4 [shape = 's32[1]{0}', space=sflag, size = 0x4, scoped, tag = 'scoped memory for tpu_custom_call.1']
    #allocation5 [shape = 'u8[4096]{0}', space=vmem, size = 0x1000, scoped, tag = 'input window, operand 1, single buffered']
    #allocation6 [shape = 's32[1]{0}', space=sflag, size = 0x4, scoped, tag = 'scoped memory for tpu_custom_call.1']
    #allocation7 [shape = 'u8[512]{0}', space=vmem, size = 0x400, scoped, tag = 'output window, operand 0, single buffered']
    %7 = vsyncpa [#allocation3], 0
    %8 = vsyncpa [#allocation6], 0
    %9 = vsyncpa [#allocation4], 0
    // Predicated region
    $region2: #{tpu_custom_call.1} parent=1 // pred_check
      _
    $region3: #{tpu_custom_call.1} parent=1 // pred_check_branch
      %11 = sbr.rel (0) target = $region5
    $region4: #{tpu_custom_call.1} parent=1 // pred_region
      %s13 = ssub.s32 128, 128
      %14 = vsyncadd [#allocation3], %s13
      %s16 = sshll.u32 [#allocation2], 4
      %s17 = int_to_ptr.vmem [resolvable:$true] %s16
      %19 = dma.hbm_to_vmem [thread:$0]  %s0, 128, %s17, [#allocation3]
    $region5: #{tpu_custom_call.1} parent=1 // pred_fallthru
      _
    // Predicated region
    $region6: #{tpu_custom_call.1} parent=1 // pred_check
      _
    $region7: #{tpu_custom_call.1} parent=1 // pred_check_branch
      %21 = sbr.rel (0) target = $region9
    $region8: #{tpu_custom_call.1} parent=1 // pred_region
      %s23 = ssub.s32 128, 128
      %24 = vsyncadd [#allocation6], %s23
      %s26 = sshll.u32 [#allocation5], 4
      %s27 = int_to_ptr.vmem [resolvable:$true] %s26
      %29 = dma.hbm_to_vmem [thread:$0]  %s1, 128, %s27, [#allocation6]
    $region9: #{tpu_custom_call.1} parent=1 // pred_fallthru
      _
    // Predicated region
    $region10: #{tpu_custom_call.1} parent=1 // pred_check
      _
    $region11: #{tpu_custom_call.1} parent=1 // pred_check_branch
      %31 = sbr.rel (0) target = $region13
    $region12: #{tpu_custom_call.1} parent=1 // pred_region
      %32 = dma.done [#allocation3], 128
    $region13: #{tpu_custom_call.1} parent=1 // pred_fallthru
      _
    // Predicated region
    $region14: #{tpu_custom_call.1} parent=1 // pred_check
      _
    $region15: #{tpu_custom_call.1} parent=1 // pred_check_branch
      %34 = sbr.rel (0) target = $region17
    $region16: #{tpu_custom_call.1} parent=1 // pred_region
      %35 = dma.done [#allocation6], 128
    $region17: #{tpu_custom_call.1} parent=1 // pred_fallthru
      _
    %v36 = vld [vmem:[#allocation2] sm:$0xff]
    %v37 = vld [vmem:[#allocation5] sm:$0xff]
    %vm38 = vcmask 261120
    %v39 = vsel %vm38, %v36, -inf
    %40 = vmax.xlane.f32.xlu0 %v39
    %v41 = vpop.xlane.xlu0 %40
    %v42 = vsub.f32 %v36, %v41
    %v43 = vmul.f32 %v42, 1.442695
    %v44 = vpow.pop %v43
    %v45 = vsel %vm38, %v44, 0.0
    %46 = vadd.xlane.f32.xlu0 %v45
    %v47 = vpop.xlane.xlu0 %46
    %v48 = vlog2.pop %v47
    %v49 = vmul.f32 %v48, 0.6931472
    %v50 = vadd.f32 %v41, %v49
    %v51 = vsel %vm38, %v36, 0.0
    %52 = vadd.xlane.f32.xlu0 %v51
    %v53 = vpop.xlane.xlu0 %52
    %v54 = vlaneseq
    %v55 = vand.u32 %v54, 127
    %56 = vset.pattern.permute.xlu0 0
    %57 = vperm.xlu0 %56, %v37
    %v58 = vpop.permute.xlu0 %57
    %vm59 = vcmp.eq.s32.totalorder %v55, %v58
    %v60 = vsel %vm59, %v36, 0.0
    %v61 = vsel %vm38, %v60, 0.0
    %62 = vadd.xlane.f32.xlu0 %v61
    %v63 = vpop.xlane.xlu0 %62
    %v64 = vmul.f32 %v50, 32.0
    %v65 = vsub.f32 %v64, %v53
    %v66 = vmul.f32 %v65, 0.009375
    %v67 = vsub.f32 %v50, %v63
    %v68 = vmul.f32 %v67, 0.7
    %v69 = vadd.f32 %v66, %v68
    %s70 = smul.u32 0, 8
    %v71 = vlaneseq
    %v72 = vshrl.u32 %v71, 7
    %v73 = vstv %s70
    %v74 = vadd.s32 %v73, %v72
    %vm75 = vcmp.lt.s32.totalorder %v74, 8
    %v76 = vsel %vm75, %v69, 0.0
    %vm77 = vcmask 7168
    %v78 = vsel %vm77, %v76, 0.0
    %79 = vadd.xlane.f32.xlu0 %v78
    %v80 = vpop.xlane.xlu0 %79
    %v81 = vrot.slane %v80, 4
    %v82 = vadd.f32 %v80, %v81
    %v83 = vrot.slane %v82, 2
    %v84 = vadd.f32 %v82, %v83
    %v85 = vrot.slane %v84, 1
    %v86 = vadd.f32 %v84, %v85
    %s87 = vtos %v86
    %vm88 = vcmp.eq.s32.totalorder %v55, 0
    %v89 = vstv %s87
    %v90 = vsel %vm88, %v89, 0.0
    %91 = vst [vmem:[#allocation7] sm:$0x1] %v90
    // Predicated region
    $region18: #{tpu_custom_call.1} parent=1 // pred_check
      _
    $region19: #{tpu_custom_call.1} parent=1 // pred_check_branch
      %93 = sbr.rel (0) target = $region21
    $region20: #{tpu_custom_call.1} parent=1 // pred_region
      %s95 = ssub.s32 16, 16
      %96 = vsyncadd [#allocation4], %s95
      %s98 = sshll.u32 [#allocation7], 4
      %s99 = int_to_ptr.vmem [resolvable:$true] %s98
      %101 = dma.vmem_to_hbm [thread:$0]  %s99, 16, %s2, [#allocation4]
    $region21: #{tpu_custom_call.1} parent=1 // pred_fallthru
      _
    // Predicated region
    $region22: #{tpu_custom_call.1} parent=1 // pred_check
      _
    $region23: #{tpu_custom_call.1} parent=1 // pred_check_branch
      %103 = sbr.rel (0) target = $region25
    $region24: #{tpu_custom_call.1} parent=1 // pred_region
      %104 = dma.done [#allocation4], 16
    $region25: #{tpu_custom_call.1} parent=1 // pred_fallthru
      _
    %105 = vsyncpa [#allocation3], 1
    %106 = vsyncpa [#allocation6], 1
    %107 = vsyncpa [#allocation4], 1

</llo_original>
